<compile_context>
chip_gen: v5e
topology: v5e:2x2
jax: 0.10.0
libtpu: 0.0.40
codegen_flags: <defaults>
</compile_context>

<pallas_src>
import numpy as np
import jax
import jax.numpy as jnp
from jax.experimental import pallas as pl
from jax.experimental.pallas import tpu as pltpu


# ---------------------------------------------------------------------------
# Host-side resize parameters (PyTorch align_corners=False convention)
# ---------------------------------------------------------------------------
def _lerp_params(in_size: int, out_size: int):
    """Two-tap source indices / weights for 1-D linear resize."""
    scale = in_size / out_size
    dst = np.arange(out_size, dtype=np.float64)
    src = np.maximum((dst + 0.5) * scale - 0.5, 0.0)   # clamp negatives to 0
    i0 = np.minimum(np.floor(src).astype(np.int64), in_size - 1)
    i1 = np.minimum(i0 + 1, in_size - 1)
    lam = (src - i0).astype(np.float32)
    return i0.astype(np.int32), i1.astype(np.int32), lam


def _resize_matrix(in_size: int, out_size: int) -> np.ndarray:
    """W[out, in] such that out = W @ in is 1-D linear interpolation."""
    i0, i1, lam = _lerp_params(in_size, out_size)
    W = np.zeros((out_size, in_size), dtype=np.float32)
    W[np.arange(out_size), i0] += 1.0 - lam
    W[np.arange(out_size), i1] += lam
    return W


def _pick_row_tile(rows: int, target: int = 512) -> int:
    """Largest tile <= target that divides `rows` and is a multiple of 8
    (or the full `rows` when no such tile exists / rows is small)."""
    if rows <= target:
        return rows
    for t in range(min(target, rows), 7, -1):
        if t % 8 == 0 and rows % t == 0:
            return t
    return rows


# ---------------------------------------------------------------------------
# Fused kernel: dtype cast + trilinear resize + (depth-mix ⊗ channel-mix) dot
# ---------------------------------------------------------------------------
def _make_skip_align_kernel(mix_first: bool):
    def kernel(x_ref, whw_ref, m_ref, b_ref, out_ref):
        # x_ref:   (1, Cin*Din, Hin*Win)     input slab of batch element n
        # whw_ref: (Hin*Win, Hout*Wout)      Kronecker H+W resize matrix
        # m_ref:   (row_tile, Cin*Din)       kron(conv_w, W_d) row tile
        # b_ref:   (row_tile, 1)             per-row bias (zeros if no bias)
        # out_ref: (1, row_tile, Hout*Wout)  lane-dense output block
        x = x_ref[0].astype(jnp.float32)                       # fused dtype cast
        if mix_first:
            t = jnp.dot(m_ref[...], x, preferred_element_type=jnp.float32)
            z = jnp.dot(t, whw_ref[...], preferred_element_type=jnp.float32)
        else:
            y = jnp.dot(x, whw_ref[...], preferred_element_type=jnp.float32)
            z = jnp.dot(m_ref[...], y, preferred_element_type=jnp.float32)
        out_ref[0] = (z + b_ref[...]).astype(out_ref.dtype)    # single cast + store
    return kernel


# ---------------------------------------------------------------------------
# SkipAlign forward
# ---------------------------------------------------------------------------
def skip_align_forward(skip, target, conv_w=None, conv_b=None):
    """skip: (N, Cin, Din, Hin, Win); target: (N, *, Dout, Hout, Wout).
    conv_w: (Cout, Cin) (or Conv3d (Cout, Cin, 1, 1, 1)) or None; conv_b: (Cout,) or None."""
    out_dtype = target.dtype
    N, Cin, Din, Hin, Win = skip.shape
    Dout, Hout, Wout = target.shape[2:]

    cin_din = Cin * Din
    hin_win = Hin * Win
    hw_out = Hout * Wout

    # Host-precomputed 1-D resize matrices (identity when sizes already match).
    WD = _resize_matrix(Din, Dout)                    # (Dout, Din)
    WH = _resize_matrix(Hin, Hout)                    # (Hout, Hin)
    WW = _resize_matrix(Win, Wout)                    # (Wout, Win)
    # Kronecker spatial resize matrix: y_flat = x_flat @ W_hw
    w_hw = jnp.asarray(np.kron(WH, WW).T)             # (Hin*Win, Hout*Wout)

    # Fused depth-resize + channel-mix matrix M (rows = (o, p), cols = (c, d)).
    if conv_w is not None:
        conv_w2d = conv_w.reshape(conv_w.shape[0], conv_w.shape[1]).astype(jnp.float32)
        Cout = conv_w2d.shape[0]
        m_mat = jnp.kron(conv_w2d, jnp.asarray(WD))   # (Cout*Dout, Cin*Din)
        if conv_b is not None:
            b_col = jnp.repeat(conv_b.astype(jnp.float32), Dout).reshape(-1, 1)
        else:
            b_col = jnp.zeros((Cout * Dout, 1), jnp.float32)
    else:
        Cout = Cin
        m_mat = jnp.asarray(np.kron(np.eye(Cin, dtype=np.float32), WD))
        b_col = jnp.zeros((Cin * Dout, 1), jnp.float32)
    R = Cout * Dout

    # Free row-major flattening of the input; output is reshaped back for free.
    skip_flat = skip.reshape(N, cin_din, hin_win)

    row_tile = _pick_row_tile(R)
    num_rt = R // row_tile
    grid = (N, num_rt)

    # Pick the cheaper contraction order (spatial-first vs mix-first).
    flops_a = N * (num_rt * 2 * cin_din * hin_win * hw_out + 2 * R * cin_din * hw_out)
    flops_b = N * (2 * R * cin_din * hin_win + 2 * R * hin_win * hw_out)
    mix_first = flops_b <= flops_a
    flops = int(min(flops_a, flops_b) + N * R * hw_out)

    in_bytes = skip.dtype.itemsize
    out_bytes = np.dtype(out_dtype).itemsize
    bytes_accessed = int(N * cin_din * hin_win * in_bytes
                         + hin_win * hw_out * 4
                         + R * cin_din * 4 + R * 4
                         + N * R * hw_out * out_bytes)

    # VMEM: double-buffered blocks + rough matmul temporaries.  Cap below the
    # 64 MiB physical VMEM of a v7x TensorCore.
    vmem_needed = (2 * cin_din * hin_win * in_bytes
                   + 2 * hin_win * hw_out * 4
                   + 2 * (row_tile * cin_din * 4 + row_tile * 4)
                   + 2 * row_tile * hw_out * out_bytes
                   + (cin_din + 2 * row_tile) * max(hin_win, hw_out) * 4)
    vmem_limit = int(min(48 << 20, max(int(1.5 * vmem_needed), 8 << 20)))

    x_spec = pl.BlockSpec((1, cin_din, hin_win), lambda n, r: (n, 0, 0))
    whw_spec = pl.BlockSpec((hin_win, hw_out), lambda n, r: (0, 0))
    m_spec = pl.BlockSpec((row_tile, cin_din), lambda n, r: (r, 0))
    b_spec = pl.BlockSpec((row_tile, 1), lambda n, r: (r, 0))
    out_spec = pl.BlockSpec((1, row_tile, hw_out), lambda n, r: (n, r, 0))

    out_flat = pl.pallas_call(
        _make_skip_align_kernel(mix_first),
        out_shape=jax.ShapeDtypeStruct((N, R, hw_out), out_dtype),
        grid_spec=pltpu.PrefetchScalarGridSpec(
            num_scalar_prefetch=0,
            grid=grid,
            in_specs=[x_spec, whw_spec, m_spec, b_spec],
            out_specs=out_spec,
        ),
        compiler_params=pltpu.CompilerParams(
            dimension_semantics=("parallel", "parallel"),
            vmem_limit_bytes=vmem_limit,
        ),
        cost_estimate=pl.CostEstimate(
            flops=flops, transcendentals=0, bytes_accessed=bytes_accessed),
    )(skip_flat, w_hw, m_mat, b_col)

    return out_flat.reshape(N, Cout, Dout, Hout, Wout)


# ---------------------------------------------------------------------------
# Pure-JAX reference (same math, f32 accumulation, single final cast)
# ---------------------------------------------------------------------------
def skip_align_reference(skip, target, conv_w=None, conv_b=None):
    out_dtype = target.dtype
    x = skip.astype(jnp.float32)
    _, Cin, Din, Hin, Win = skip.shape
    Dout, Hout, Wout = target.shape[2:]
    WD = jnp.asarray(_resize_matrix(Din, Dout))
    WH = jnp.asarray(_resize_matrix(Hin, Hout))
    WW = jnp.asarray(_resize_matrix(Win, Wout))
    x = jnp.einsum("ncdhw,pd,qh,rw->ncpqr", x, WD, WH, WW,
                   precision=jax.lax.Precision.HIGHEST)
    if conv_w is not None:
        w2d = conv_w.reshape(conv_w.shape[0], conv_w.shape[1]).astype(jnp.float32)
        x = jnp.einsum("ncdhw,oc->nodhw", x, w2d,
                       precision=jax.lax.Precision.HIGHEST)
        if conv_b is not None:
            x = x + conv_b.astype(jnp.float32)[None, :, None, None, None]
    return x.astype(out_dtype)


if __name__ == "__main__":
    key = jax.random.PRNGKey(0)
    k1, k2, k3, k4, k5, k6 = jax.random.split(key, 6)

    # --- SkipAlign(skip_in_channels=3, out_channels=5, spatial_dims=3,
    #               channel_match=True, mode='trilinear', align_corners=False)
    N, Cin, Cout = 2, 3, 5
    skip = jax.random.normal(k1, (N, Cin, 4, 8, 8), dtype=jnp.float32)
    target = jax.random.normal(k2, (N, Cout, 8, 16, 16), dtype=jnp.float32)
    conv_w = jax.random.normal(k3, (Cout, Cin), dtype=jnp.float32) / jnp.sqrt(float(Cin))
    conv_b = jax.random.normal(k4, (Cout,), dtype=jnp.float32) * 0.1

    fwd = jax.jit(skip_align_forward)
    out = jax.block_until_ready(fwd(skip, target, conv_w, conv_b))
    ref = jax.block_until_ready(skip_align_reference(skip, target, conv_w, conv_b))

    assert out.shape == (N, Cout, 8, 16, 16), out.shape
    assert out.dtype == target.dtype, out.dtype
    np.testing.assert_allclose(np.asarray(out), np.asarray(ref), rtol=2e-3, atol=2e-3)

    # --- conv without bias (robustness; PyTorch spec always uses bias=True)
    out_nb = jax.block_until_ready(fwd(skip, target, conv_w, None))
    ref_nb = jax.block_until_ready(skip_align_reference(skip, target, conv_w, None))
    np.testing.assert_allclose(np.asarray(out_nb), np.asarray(ref_nb), rtol=2e-3, atol=2e-3)

    # --- channels already match -> conv1x1 is None (resize + cast only),
    #     bf16 target exercises the fused dtype cast.
    skip2 = jax.random.normal(k5, (2, 4, 4, 8, 8), dtype=jnp.float32)
    target2 = jax.random.normal(k6, (2, 4, 8, 16, 16), dtype=jnp.bfloat16)
    out2 = jax.block_until_ready(fwd(skip2, target2, None, None))
    ref2 = jax.block_until_ready(skip_align_reference(skip2, target2, None, None))

    assert out2.shape == (2, 4, 8, 16, 16), out2.shape
    assert out2.dtype == target2.dtype, out2.dtype
    np.testing.assert_allclose(np.asarray(out2, dtype=np.float32),
                               np.asarray(ref2, dtype=np.float32),
                               rtol=5e-2, atol=5e-2)

    print("KERNEL_OK")
</pallas_src>

<mosaic_0001>
module attributes {stable_mosaic.version = 11 : i64} {
  func.func @kernel(%arg0: i32, %arg1: i32, %arg2: memref<1x12x64xf32, #tpu.memory_space<vmem>>, %arg3: memref<64x256xf32, #tpu.memory_space<vmem>>, %arg4: memref<40x12xf32, #tpu.memory_space<vmem>>, %arg5: memref<40x1xf32, #tpu.memory_space<vmem>>, %arg6: memref<1x40x256xf32, #tpu.memory_space<vmem>>) attributes {dimension_semantics = [#tpu.dimension_semantics<parallel>, #tpu.dimension_semantics<parallel>], iteration_bounds = array<i64: 2, 1>, scalar_prefetch = 0 : i64, scratch_operands = 0 : i64, tpu.core_type = #tpu.core_type<tc>, window_params = [{transform_indices = @transform_0, window_bounds = array<i64: 1, 12, 64>}, {pipeline_mode = #tpu.pipeline_mode<synchronous>, transform_indices = @transform_1, window_bounds = array<i64: 64, 256>}, {transform_indices = @transform_2, window_bounds = array<i64: 40, 12>}, {transform_indices = @transform_3, window_bounds = array<i64: 40, 1>}, {transform_indices = @transform_4, window_bounds = array<i64: 1, 40, 256>}]} {
    %c0 = arith.constant 0 : index
    %c0_0 = arith.constant 0 : index
    %c0_1 = arith.constant 0 : index
    %0 = vector.load %arg2[%c0, %c0_0, %c0_1] : memref<1x12x64xf32, #tpu.memory_space<vmem>>, vector<1x12x64xf32>
    %1 = vector.shape_cast %0 : vector<1x12x64xf32> to vector<12x64xf32>
    %c0_2 = arith.constant 0 : index
    %c0_3 = arith.constant 0 : index
    %2 = vector.load %arg3[%c0_2, %c0_3] : memref<64x256xf32, #tpu.memory_space<vmem>>, vector<64x256xf32>
    %cst = arith.constant dense<0.000000e+00> : vector<12x256xf32>
    %3 = tpu.matmul %1, %2, %cst {dimension_numbers = #tpu.dot_dimension_numbers<[1], [0], [0], [1], [0, 0, 1, 1], [], []>} : vector<12x64xf32>, vector<64x256xf32>, vector<12x256xf32> -> vector<12x256xf32>
    %c0_4 = arith.constant 0 : index
    %c0_5 = arith.constant 0 : index
    %4 = vector.load %arg4[%c0_4, %c0_5] : memref<40x12xf32, #tpu.memory_space<vmem>>, vector<40x12xf32>
    %cst_6 = arith.constant dense<0.000000e+00> : vector<40x256xf32>
    %5 = tpu.matmul %4, %3, %cst_6 {dimension_numbers = #tpu.dot_dimension_numbers<[1], [0], [0], [1], [0, 0, 1, 1], [], []>} : vector<40x12xf32>, vector<12x256xf32>, vector<40x256xf32> -> vector<40x256xf32>
    %c0_7 = arith.constant 0 : index
    %c0_8 = arith.constant 0 : index
    %6 = vector.load %arg5[%c0_7, %c0_8] : memref<40x1xf32, #tpu.memory_space<vmem>>, vector<40x1xf32>
    %7 = vector.broadcast %6 : vector<40x1xf32> to vector<40x256xf32>
    %8 = arith.addf %5, %7 : vector<40x256xf32>
    %c0_9 = arith.constant 0 : index
    %c0_10 = arith.constant 0 : index
    %c0_11 = arith.constant 0 : index
    %9 = vector.load %arg6[%c0_9, %c0_10, %c0_11] : memref<1x40x256xf32, #tpu.memory_space<vmem>>, vector<1x40x256xf32>
    %10 = vector.shape_cast %9 : vector<1x40x256xf32> to vector<40x256xf32>
    %11 = vector.shape_cast %8 : vector<40x256xf32> to vector<1x40x256xf32>
    tpu.vector_store %arg6[%c0_9, %c0_10, %c0_11], %11 {strides = array<i32>} : memref<1x40x256xf32, #tpu.memory_space<vmem>>, vector<1x40x256xf32>,
    return
  }
  func.func @transform_0(%arg0: i32, %arg1: i32) -> (i32, i32, i32) {
    %c0_i32 = arith.constant 0 : i32
    %c0_i32_0 = arith.constant 0 : i32
    %c0_i32_1 = arith.constant 0 : i32
    return %arg0, %c0_i32, %c0_i32_0 : i32, i32, i32
  }
  func.func @transform_1(%arg0: i32, %arg1: i32) -> (i32, i32) {
    %c0_i32 = arith.constant 0 : i32
    %c0_i32_0 = arith.constant 0 : i32
    %c0_i32_1 = arith.constant 0 : i32
    return %c0_i32, %c0_i32_0 : i32, i32
  }
  func.func @transform_2(%arg0: i32, %arg1: i32) -> (i32, i32) {
    %c0_i32 = arith.constant 0 : i32
    %c0_i32_0 = arith.constant 0 : i32
    return %arg1, %c0_i32 : i32, i32
  }
  func.func @transform_3(%arg0: i32, %arg1: i32) -> (i32, i32) {
    %c0_i32 = arith.constant 0 : i32
    %c0_i32_0 = arith.constant 0 : i32
    return %arg1, %c0_i32 : i32, i32
  }
  func.func @transform_4(%arg0: i32, %arg1: i32) -> (i32, i32, i32) {
    %c0_i32 = arith.constant 0 : i32
    %c0_i32_0 = arith.constant 0 : i32
    return %arg0, %arg1, %c0_i32 : i32, i32, i32
  }
}

</mosaic_0001>

<llo_original>
// kernel: skip_align_forward.1
$region0: #{skip_align_forward.1}
  #allocation0 [shape = 'u32[]', space=smem, size = 0x4, offset = 0x4, fixed_abs, tag = 'smem constant byte address 0x4 - core index']
  #allocation1 [shape = 'u32[72,128]{1,0:T(1,128)}', space=vmem, size = 0x9000, scoped, tag = 'internal scratch']
  %s0 = inlined_call_operand.vmem [shape: f32[2,12,64], index: 0, kind: input, shape index: {}]
  %s1 = inlined_call_operand.vmem [shape: f32[64,256], index: 1, kind: input, shape index: {}]
  %s2 = inlined_call_operand.vmem [shape: f32[40,12], index: 2, kind: input, shape index: {}]
  %s3 = inlined_call_operand.vmem [shape: f32[40,1], index: 3, kind: input, shape index: {}]
  %s4 = inlined_call_operand.vmem [shape: f32[2,40,256], index: 4, kind: output, shape index: {}]
  %s5 = sld [smem:[#allocation0]]
  $region49: #{skip_align_forward.1} parent=0
    _
  %s7 = ssub.s32 1, %s5
  %s8 = scalar_select 0, %s7, %s5
  loop: start=0, step=1, limit=4
  $region2: #{skip_align_forward.1} parent=0 // loop_pre_header
    _
  $region3: #{skip_align_forward.1} parent=0 // loop_header
    %s10 = sphi 0, %s14
    %p11 = scmp.ge.s32.totalorder %s10, 4
    %s17 = sphi 0, %s29
    %s18 = sphi 0, %s25
    %s19 = sphi 0, %s17
    %s20 = sphi 0, %s18
    %s21 = sphi 0, %s19
    %s22 = sphi 0, %s20
    %s32 = sphi 0, %s34
    %s35 = sphi 0, %s32
    %s36 = sphi 0, %s35
    %s52 = sphi 0, %s36
    %s56 = sphi 0, %s56
    %s58 = sphi 0, %s56
    %s59 = sphi 0, %s58
    %s73 = sphi 0, %s59
    %s79 = sphi 0, %s81
    %s82 = sphi 0, %s79
    %s83 = sphi 0, %s82
    %s99 = sphi 0, %s83
    %s105 = sphi 0, %s107
    %s108 = sphi 0, %s105
    %s109 = sphi 0, %s108
    %s125 = sphi 0, %s109
    %s133 = sphi 0, %s135
    %s136 = sphi 0, %s133
    %s137 = sphi 0, %s136
    %s153 = sphi 0, %s137
  $region4: #{skip_align_forward.1} parent=0 // loop_header_branch
    %13 = sbr.rel (%p11) target = $region8
  $region5: #{skip_align_forward.1} parent=0 // loop_body
    %s15 = ssub.s32 %s10, 1
    %s16 = ssub.s32 %s10, 2
    %s23 = sadd.s32 1, %s18
    %p24 = scmp.ge.s32.totalorder %s23, 1
    %s25 = scalar_select %p24, 0, %s23
    %s26 = sadd.s32 1, %s17
    %s27 = scalar_select %p24, %s26, %s17
    %p28 = scmp.ge.s32.totalorder %s27, 2
    %s29 = scalar_select %p28, 0, %s27
    %s30 = ssub.s32 %s17, %s29
    %p31 = scmp.eq.s32.totalorder %s30, 0
    %s33 = sadd.s32 %s32, 1
    %s34 = scalar_select %p31, %s32, %s33
    %p37 = pneg %p31
    %p38 = scmp.eq.s32.totalorder %s10, 1
    %p39 = por %p37, %p38
    %p40 = scmp.ne.s32.totalorder %s32, %s35
    %p41 = scmp.eq.s32.totalorder %s10, 0
    %p42 = por %p40, %p41
    %p43 = scmp.ne.s32.totalorder %s32, %s35
    %p44 = scmp.eq.s32.totalorder %s15, 1
    %p45 = por %p43, %p44
    %p46 = scmp.ne.s32.totalorder %s35, %s36
    %p47 = scmp.eq.s32.totalorder %s15, 0
    %p48 = por %p46, %p47
    %p49 = scmp.ne.s32.totalorder %s35, %s36
    %p50 = scmp.eq.s32.totalorder %s16, 1
    %p51 = por %p49, %p50
    %p53 = scmp.ne.s32.totalorder %s36, %s52
    %p54 = scmp.eq.s32.totalorder %s16, 0
    %p55 = por %p53, %p54
    %s57 = sadd.s32 %s56, 1
    %p60 = scmp.eq.s32.totalorder %s10, 1
    %p61 = scmp.ne.s32.totalorder %s56, %s58
    %p62 = scmp.eq.s32.totalorder %s10, 0
    %p63 = por %p61, %p62
    %p64 = scmp.ne.s32.totalorder %s56, %s58
    %p65 = scmp.eq.s32.totalorder %s15, 1
    %p66 = por %p64, %p65
    %p67 = scmp.ne.s32.totalorder %s58, %s59
    %p68 = scmp.eq.s32.totalorder %s15, 0
    %p69 = por %p67, %p68
    %p70 = scmp.ne.s32.totalorder %s58, %s59
    %p71 = scmp.eq.s32.totalorder %s16, 1
    %p72 = por %p70, %p71
    %p74 = scmp.ne.s32.totalorder %s59, %s73
    %p75 = scmp.eq.s32.totalorder %s16, 0
    %p76 = por %p74, %p75
    %s77 = ssub.s32 %s18, %s25
    %p78 = scmp.eq.s32.totalorder %s77, 0
    %s80 = sadd.s32 %s79, 1
    %s81 = scalar_select %p78, %s79, %s80
    %p84 = pneg %p78
    %p85 = scmp.eq.s32.totalorder %s10, 1
    %p86 = por %p84, %p85
    %p87 = scmp.ne.s32.totalorder %s79, %s82
    %p88 = scmp.eq.s32.totalorder %s10, 0
    %p89 = por %p87, %p88
    %p90 = scmp.ne.s32.totalorder %s79, %s82
    %p91 = scmp.eq.s32.totalorder %s15, 1
    %p92 = por %p90, %p91
    %p93 = scmp.ne.s32.totalorder %s82, %s83
    %p94 = scmp.eq.s32.totalorder %s15, 0
    %p95 = por %p93, %p94
    %p96 = scmp.ne.s32.totalorder %s82, %s83
    %p97 = scmp.eq.s32.totalorder %s16, 1
    %p98 = por %p96, %p97
    %p100 = scmp.ne.s32.totalorder %s83, %s99
    %p101 = scmp.eq.s32.totalorder %s16, 0
    %p102 = por %p100, %p101
    %s103 = ssub.s32 %s18, %s25
    %p104 = scmp.eq.s32.totalorder %s103, 0
    %s106 = sadd.s32 %s105, 1
    %s107 = scalar_select %p104, %s105, %s106
    %p110 = pneg %p104
    %p111 = scmp.eq.s32.totalorder %s10, 1
    %p112 = por %p110, %p111
    %p113 = scmp.ne.s32.totalorder %s105, %s108
    %p114 = scmp.eq.s32.totalorder %s10, 0
    %p115 = por %p113, %p114
    %p116 = scmp.ne.s32.totalorder %s105, %s108
    %p117 = scmp.eq.s32.totalorder %s15, 1
    %p118 = por %p116, %p117
    %p119 = scmp.ne.s32.totalorder %s108, %s109
    %p120 = scmp.eq.s32.totalorder %s15, 0
    %p121 = por %p119, %p120
    %p122 = scmp.ne.s32.totalorder %s108, %s109
    %p123 = scmp.eq.s32.totalorder %s16, 1
    %p124 = por %p122, %p123
    %p126 = scmp.ne.s32.totalorder %s109, %s125
    %p127 = scmp.eq.s32.totalorder %s16, 0
    %p128 = por %p126, %p127
    %s129 = ssub.s32 %s17, %s29
    %s130 = ssub.s32 %s18, %s25
    %s131 = sor.u32 %s129, %s130
    %p132 = scmp.eq.s32.totalorder %s131, 0
    %s134 = sadd.s32 %s133, 1
    %s135 = scalar_select %p132, %s133, %s134
    %p138 = pneg %p132
    %p139 = scmp.eq.s32.totalorder %s10, 1
    %p140 = por %p138, %p139
    %p141 = scmp.ne.s32.totalorder %s133, %s136
    %p142 = scmp.eq.s32.totalorder %s10, 0
    %p143 = por %p141, %p142
    %p144 = scmp.ne.s32.totalorder %s133, %s136
    %p145 = scmp.eq.s32.totalorder %s15, 1
    %p146 = por %p144, %p145
    %p147 = scmp.ne.s32.totalorder %s136, %s137
    %p148 = scmp.eq.s32.totalorder %s15, 0
    %p149 = por %p147, %p148
    %p150 = scmp.ne.s32.totalorder %s136, %s137
    %p151 = scmp.eq.s32.totalorder %s16, 1
    %p152 = por %p150, %p151
    %p154 = scmp.ne.s32.totalorder %s137, %s153
    %p155 = scmp.eq.s32.totalorder %s16, 0
    %p156 = por %p154, %p155
    %p157 = scmp.le.s32.totalorder 1, %s10
    %p158 = scmp.lt.s32.totalorder %s10, 3
    %p159 = pnand %p157, %p158
    %p160 = pneg %p159
    // Predicated region
    $region9: #{skip_align_forward.1} parent=5 // pred_check
      _
    $region10: #{skip_align_forward.1} parent=5 // pred_check_branch
      %162 = sbr.rel (%p159) target = $region12
    $region11: #{skip_align_forward.1} parent=5 // pred_region
      %s163 = ssub.s32 %s10, 1
      // Predicated region
      $region13: #{skip_align_forward.1} parent=11 // pred_check
        %p164 = pneg %p69
      $region14: #{skip_align_forward.1} parent=11 // pred_check_branch
        %166 = sbr.rel (%p164) target = $region16
      $region15: #{skip_align_forward.1} parent=11 // pred_region
        _
      $region16: #{skip_align_forward.1} parent=11 // pred_fallthru
        _
      // Predicated region
      $region17: #{skip_align_forward.1} parent=11 // pred_check
        %p167 = pneg %p95
      $region18: #{skip_align_forward.1} parent=11 // pred_check_branch
        %169 = sbr.rel (%p167) target = $region20
      $region19: #{skip_align_forward.1} parent=11 // pred_region
        %s170 = smul.u32 5, %s20
        %p171 = scmp.lt.s32.totalorder %s170, 4
        %s172 = scalar_select %p171, %s170, 4
        %s173 = smul.addr %s172, 8
        %s174 = scalar_lea.vmem %s2, %s173
        %s175 = smul.u32 5, %s20
      $region20: #{skip_align_forward.1} parent=11 // pred_fallthru
        _
      // Predicated region
      $region21: #{skip_align_forward.1} parent=11 // pred_check
        %p176 = pneg %p121
      $region22: #{skip_align_forward.1} parent=11 // pred_check_branch
        %178 = sbr.rel (%p176) target = $region24
      $region23: #{skip_align_forward.1} parent=11 // pred_region
        %s179 = smul.u32 5, %s20
        %p180 = scmp.lt.s32.totalorder %s179, 4
        %s181 = scalar_select %p180, %s179, 4
        %s182 = smul.addr %s181, 8
        %s183 = scalar_lea.vmem %s3, %s182
        %s184 = smul.u32 5, %s20
      $region24: #{skip_align_forward.1} parent=11 // pred_fallthru
        _
    $region12: #{skip_align_forward.1} parent=5 // pred_fallthru
      _
    %p185 = scmp.lt.s32.totalorder %s10, 2
    // Predicated region
    $region25: #{skip_align_forward.1} parent=5 // pred_check
      %p186 = pneg %p185
    $region26: #{skip_align_forward.1} parent=5 // pred_check_branch
      %188 = sbr.rel (%p186) target = $region28
    $region27: #{skip_align_forward.1} parent=5 // pred_region
      // Predicated region
      $region29: #{skip_align_forward.1} parent=27 // pred_check
        %p189 = pneg %p42
      $region30: #{skip_align_forward.1} parent=27 // pred_check_branch
        %191 = sbr.rel (%p189) target = $region32
      $region31: #{skip_align_forward.1} parent=27 // pred_region
        %p192 = scmp.lt.s32.totalorder %s17, 1
        %s193 = scalar_select %p192, %s17, 1
        %s194 = smul.addr %s193, 2
        %s195 = smul.addr %s194, 8
        %s196 = scalar_lea.vmem %s0, %s195
      $region32: #{skip_align_forward.1} parent=27 // pred_fallthru
        _
    $region28: #{skip_align_forward.1} parent=5 // pred_fallthru
      _
    %p197 = scmp.le.s32.totalorder 1, %s10
    %p198 = scmp.lt.s32.totalorder %s10, 3
    %p199 = pnand %p197, %p198
    %p200 = pneg %p199
    // Predicated region
    $region33: #{skip_align_forward.1} parent=5 // pred_check
      _
    $region34: #{skip_align_forward.1} parent=5 // pred_check_branch
      %202 = sbr.rel (%p199) target = $region36
    $region35: #{skip_align_forward.1} parent=5 // pred_region
      %s203 = ssub.s32 %s10, 1
      %p204 = scmp.lt.s32.totalorder %s19, 1
      %s205 = scalar_select %p204, %s19, 1
      %s206 = smul.addr %s205, 2
      %s207 = smul.addr %s206, 8
      %s208 = scalar_lea.vmem %s0, %s207
      %p209 = pneg %p48
      %p210 = pneg %p45
      %p211 = pneg %p69
      %p212 = pneg %p66
      %s213 = smul.u32 5, %s20
      %p214 = scmp.lt.s32.totalorder %s213, 4
      %s215 = scalar_select %p214, %s213, 4
      %s216 = smul.addr %s215, 8
      %s217 = scalar_lea.vmem %s2, %s216
      %p218 = pneg %p95
      %p219 = pneg %p92
      %s220 = smul.u32 5, %s20
      %p221 = scmp.lt.s32.totalorder %s220, 4
      %s222 = scalar_select %p221, %s220, 4
      %s223 = smul.addr %s222, 8
      %s224 = scalar_lea.vmem %s3, %s223
      %p225 = pneg %p121
      %p226 = pneg %p118
      %p227 = pneg %p149
      %p228 = pneg %p146
      %s229 = smul.u32 5, %s20
      %p230 = scmp.lt.s32.totalorder %s19, 1
      %s231 = scalar_select %p230, %s19, 1
      %p232 = scmp.lt.s32.totalorder %s229, 4
      %s233 = scalar_select %p232, %s229, 4
      %s234 = smul.addr %s233, 2
      %s235 = smul.addr %s231, 10
      %s236 = sadd.s32 %s234, %s235
      %s237 = smul.addr %s236, 8
      %s238 = scalar_lea.vmem %s4, %s237
      %p239 = scmp.lt.s32.totalorder %s19, 1
      %s240 = scalar_select %p239, %s19, 1
      %s241 = smul.addr %s240, 2
      %s242 = smul.addr %s241, 8
      %s243 = scalar_lea.vmem %s0, %s242
      %s244 = smul.u32 5, %s20
      %p245 = scmp.lt.s32.totalorder %s244, 4
      %s246 = scalar_select %p245, %s244, 4
      %s247 = smul.addr %s246, 8
      %s248 = scalar_lea.vmem %s2, %s247
      %s249 = smul.u32 5, %s20
      %s250 = smul.u32 5, %s20
      %p251 = scmp.lt.s32.totalorder %s250, 4
      %s252 = scalar_select %p251, %s250, 4
      %s253 = smul.addr %s252, 8
      %s254 = scalar_lea.vmem %s3, %s253
      %s255 = smul.u32 5, %s20
      %s256 = smul.u32 5, %s20
      %p257 = scmp.lt.s32.totalorder %s19, 1
      %s258 = scalar_select %p257, %s19, 1
      %p259 = scmp.lt.s32.totalorder %s256, 4
      %s260 = scalar_select %p259, %s256, 4
      %s261 = smul.addr %s260, 2
      %s262 = smul.addr %s258, 10
      %s263 = sadd.s32 %s261, %s262
      %s264 = smul.addr %s263, 8
      %s265 = scalar_lea.vmem %s4, %s264
      %s266 = smul.u32 5, %s20
      %v267 = vld [vmem:[%s243] sm:$0xff]
      %v268 = vld [vmem:[%s243 + $0x8] sm:$0xf]
      %v269 = vld [vmem:[%s1] sm:$0xff]
      %v270 = vld [vmem:[%s1 + $0x8] sm:$0xff]
      %v271 = vld [vmem:[%s1 + $0x10] sm:$0xff]
      %v272 = vld [vmem:[%s1 + $0x18] sm:$0xff]
      %v273 = vld [vmem:[%s1 + $0x20] sm:$0xff]
      %v274 = vld [vmem:[%s1 + $0x28] sm:$0xff]
      %v275 = vld [vmem:[%s1 + $0x30] sm:$0xff]
      %v276 = vld [vmem:[%s1 + $0x38] sm:$0xff]
      %v277 = vld [vmem:[%s1 + $0x40] sm:$0xff]
      %v278 = vld [vmem:[%s1 + $0x48] sm:$0xff]
      %v279 = vld [vmem:[%s1 + $0x50] sm:$0xff]
      %v280 = vld [vmem:[%s1 + $0x58] sm:$0xff]
      %v281 = vld [vmem:[%s1 + $0x60] sm:$0xff]
      %v282 = vld [vmem:[%s1 + $0x68] sm:$0xff]
      %v283 = vld [vmem:[%s1 + $0x70] sm:$0xff]
      %v284 = vld [vmem:[%s1 + $0x78] sm:$0xff]
      %vm285 = vcmask 523264
      %v287 = vsel %vm285, %v267, 0
      %v290 = vsel %vm285, %v268, 0
      %292 = vmatpush.msra.mxu0 0.0
      %293 = vmatpush.msra.mxu0 0.0
      %294 = vmatpush.msra.mxu0 0.0
      %295 = vmatpush.msra.mxu0 0.0
      %296 = vmatpush.msra.mxu0 0.0
      %297 = vmatpush.msra.mxu0 0.0
      %298 = vmatpush.msra.mxu0 0.0
      %299 = vmatpush.msra.mxu0 0.0
      %300 = vmatpush.msra.mxu0 %v283
      %301 = vmatpush.msra.mxu0 %v281
      %302 = vmatpush.msra.mxu0 %v279
      %303 = vmatpush.msra.mxu0 %v277
      %304 = vmatpush.msra.mxu0 %v275
      %305 = vmatpush.msra.mxu0 %v273
      %306 = vmatpush.msra.mxu0 %v271
      %307 = vmatpush.msra.mxu0 %v269
      %308 = vmatmul.f32.gmra.mxu0 %v287
      %v309 = vpop.f32.mrf.mxu0
      %v310 = vadd.f32 0.0, %v309
      %311 = vmatmul.f32.gmra.mxu0 %v290
      %v312 = vpop.f32.mrf.mxu0
      %v313 = vadd.f32 0.0, %v312
      %314 = vdwg.mxu0
      %315 = vmatpush.msra.mxu0 0.0
      %316 = vmatpush.msra.mxu0 0.0
      %317 = vmatpush.msra.mxu0 0.0
      %318 = vmatpush.msra.mxu0 0.0
      %319 = vmatpush.msra.mxu0 0.0
      %320 = vmatpush.msra.mxu0 0.0
      %321 = vmatpush.msra.mxu0 0.0
      %322 = vmatpush.msra.mxu0 0.0
      %323 = vmatpush.msra.mxu0 %v284
      %324 = vmatpush.msra.mxu0 %v282
      %325 = vmatpush.msra.mxu0 %v280
      %326 = vmatpush.msra.mxu0 %v278
      %327 = vmatpush.msra.mxu0 %v276
      %328 = vmatpush.msra.mxu0 %v274
      %329 = vmatpush.msra.mxu0 %v272
      %330 = vmatpush.msra.mxu0 %v270
      %331 = vmatmul.f32.gmra.mxu0 %v287
      %v332 = vpop.f32.mrf.mxu0
      %v333 = vadd.f32 0.0, %v332
      %334 = vmatmul.f32.gmra.mxu0 %v290
      %v335 = vpop.f32.mrf.mxu0
      %v336 = vadd.f32 0.0, %v335
      %337 = vdwg.mxu0
      %v338 = vld [vmem:[%s248] sm:$0xff]
      %v339 = vld [vmem:[%s248 + $0x8] sm:$0xff]
      %v340 = vld [vmem:[%s248 + $0x10] sm:$0xff]
      %v341 = vld [vmem:[%s248 + $0x18] sm:$0xff]
      %v342 = vld [vmem:[%s248 + $0x20] sm:$0xff]
      %v343 = vld [vmem:[%s254] sm:$0xff]
      %v344 = vld [vmem:[%s254 + $0x8] sm:$0xff]
      %v345 = vld [vmem:[%s254 + $0x10] sm:$0xff]
      %v346 = vld [vmem:[%s254 + $0x18] sm:$0xff]
      %v347 = vld [vmem:[%s254 + $0x20] sm:$0xff]
      %349 = vset.pattern.permute.xlu0 0
      %350 = vperm.xlu0 %349, %v343
      %v351 = vpop.permute.xlu0 %350
      %354 = vset.pattern.permute.xlu0 0
      %355 = vperm.xlu0 %354, %v344
      %v356 = vpop.permute.xlu0 %355
      %359 = vset.pattern.permute.xlu0 0
      %360 = vperm.xlu0 %359, %v345
      %v361 = vpop.permute.xlu0 %360
      %364 = vset.pattern.permute.xlu0 0
      %365 = vperm.xlu0 %364, %v346
      %v366 = vpop.permute.xlu0 %365
      %369 = vset.pattern.permute.xlu0 0
      %370 = vperm.xlu0 %369, %v347
      %v371 = vpop.permute.xlu0 %370
      %vm373 = vcmask 97280
      %v375 = vsel %vm373, %v338, 0
      %v378 = vsel %vm373, %v339, 0
      %v381 = vsel %vm373, %v340, 0
      %v384 = vsel %vm373, %v341, 0
      %v387 = vsel %vm373, %v342, 0
      %vm389 = vcmask 1043456
      %v391 = vsel %vm389, %v313, 0
      %v394 = vsel %vm389, %v336, 0
      %396 = vmatpush.msra.mxu0 0.0
      %397 = vmatpush.msra.mxu0 0.0
      %398 = vmatpush.msra.mxu0 0.0
      %399 = vmatpush.msra.mxu0 0.0
      %400 = vmatpush.msra.mxu0 0.0
      %401 = vmatpush.msra.mxu0 0.0
      %402 = vmatpush.msra.mxu0 0.0
      %403 = vmatpush.msra.mxu0 0.0
      %404 = vmatpush.msra.mxu0 0.0
      %405 = vmatpush.msra.mxu0 0.0
      %406 = vmatpush.msra.mxu0 0.0
      %407 = vmatpush.msra.mxu0 0.0
      %408 = vmatpush.msra.mxu0 0.0
      %409 = vmatpush.msra.mxu0 0.0
      %410 = vmatpush.msra.mxu0 %v391
      %411 = vmatpush.msra.mxu0 %v310
      %412 = vmatmul.f32.gmra.mxu0 %v375
      %v413 = vpop.f32.mrf.mxu0
      %v414 = vadd.f32 %v351, %v413
      %415 = vmatmul.f32.gmra.mxu0 %v378
      %v416 = vpop.f32.mrf.mxu0
      %v417 = vadd.f32 %v356, %v416
      %418 = vmatmul.f32.gmra.mxu0 %v381
      %v419 = vpop.f32.mrf.mxu0
      %v420 = vadd.f32 %v361, %v419
      %421 = vmatmul.f32.gmra.mxu0 %v384
      %v422 = vpop.f32.mrf.mxu0
      %v423 = vadd.f32 %v366, %v422
      %424 = vmatmul.f32.gmra.mxu0 %v387
      %v425 = vpop.f32.mrf.mxu0
      %v426 = vadd.f32 %v371, %v425
      %427 = vdwg.mxu0
      %428 = vmatpush.msra.mxu0 0.0
      %429 = vmatpush.msra.mxu0 0.0
      %430 = vmatpush.msra.mxu0 0.0
      %431 = vmatpush.msra.mxu0 0.0
      %432 = vmatpush.msra.mxu0 0.0
      %433 = vmatpush.msra.mxu0 0.0
      %434 = vmatpush.msra.mxu0 0.0
      %435 = vmatpush.msra.mxu0 0.0
      %436 = vmatpush.msra.mxu0 0.0
      %437 = vmatpush.msra.mxu0 0.0
      %438 = vmatpush.msra.mxu0 0.0
      %439 = vmatpush.msra.mxu0 0.0
      %440 = vmatpush.msra.mxu0 0.0
      %441 = vmatpush.msra.mxu0 0.0
      %442 = vmatpush.msra.mxu0 %v394
      %443 = vmatpush.msra.mxu0 %v333
      %444 = vmatmul.f32.gmra.mxu0 %v375
      %v445 = vpop.f32.mrf.mxu0
      %v446 = vadd.f32 %v351, %v445
      %447 = vmatmul.f32.gmra.mxu0 %v378
      %v448 = vpop.f32.mrf.mxu0
      %v449 = vadd.f32 %v356, %v448
      %450 = vmatmul.f32.gmra.mxu0 %v381
      %v451 = vpop.f32.mrf.mxu0
      %v452 = vadd.f32 %v361, %v451
      %453 = vmatmul.f32.gmra.mxu0 %v384
      %v454 = vpop.f32.mrf.mxu0
      %v455 = vadd.f32 %v366, %v454
      %456 = vmatmul.f32.gmra.mxu0 %v387
      %v457 = vpop.f32.mrf.mxu0
      %v458 = vadd.f32 %v371, %v457
      %459 = vdwg.mxu0
      %460 = vst [vmem:[%s265] sm:$0xff] %v414
      %461 = vst [vmem:[%s265 + $0x8] sm:$0xff] %v446
      %462 = vst [vmem:[%s265 + $0x10] sm:$0xff] %v417
      %463 = vst [vmem:[%s265 + $0x18] sm:$0xff] %v449
      %464 = vst [vmem:[%s265 + $0x20] sm:$0xff] %v420
      %465 = vst [vmem:[%s265 + $0x28] sm:$0xff] %v452
      %466 = vst [vmem:[%s265 + $0x30] sm:$0xff] %v423
      %467 = vst [vmem:[%s265 + $0x38] sm:$0xff] %v455
      %468 = vst [vmem:[%s265 + $0x40] sm:$0xff] %v426
      %469 = vst [vmem:[%s265 + $0x48] sm:$0xff] %v458
      %s470 = smul.u32 5, %s20
      %p471 = scmp.lt.s32.totalorder %s19, 1
      %s472 = scalar_select %p471, %s19, 1
      %p473 = scmp.lt.s32.totalorder %s470, 4
      %s474 = scalar_select %p473, %s470, 4
      %s475 = smul.addr %s474, 2
      %s476 = smul.addr %s472, 10
      %s477 = sadd.s32 %s475, %s476
      %s478 = smul.addr %s477, 8
      %s479 = scalar_lea.vmem %s4, %s478
      // Predicated region
      $region37: #{skip_align_forward.1} parent=35 // pred_check
        %p480 = pneg %p146
      $region38: #{skip_align_forward.1} parent=35 // pred_check_branch
        %482 = sbr.rel (%p480) target = $region40
      $region39: #{skip_align_forward.1} parent=35 // pred_region
        %s483 = smul.u32 5, %s20
      $region40: #{skip_align_forward.1} parent=35 // pred_fallthru
        _
    $region36: #{skip_align_forward.1} parent=5 // pred_fallthru
      _
    %p484 = scmp.le.s32.totalorder 2, %s10
    // Predicated region
    $region41: #{skip_align_forward.1} parent=5 // pred_check
      %p485 = pneg %p484
    $region42: #{skip_align_forward.1} parent=5 // pred_check_branch
      %487 = sbr.rel (%p485) target = $region44
    $region43: #{skip_align_forward.1} parent=5 // pred_region
      %s488 = ssub.s32 %s10, 2
      // Predicated region
      $region45: #{skip_align_forward.1} parent=43 // pred_check
        %p489 = pneg %p152
      $region46: #{skip_align_forward.1} parent=43 // pred_check_branch
        %491 = sbr.rel (%p489) target = $region48
      $region47: #{skip_align_forward.1} parent=43 // pred_region
        %s492 = smul.u32 5, %s22
        %p493 = scmp.lt.s32.totalorder %s21, 1
        %s494 = scalar_select %p493, %s21, 1
        %p495 = scmp.lt.s32.totalorder %s492, 4
        %s496 = scalar_select %p495, %s492, 4
        %s497 = smul.addr %s496, 2
        %s498 = smul.addr %s494, 10
        %s499 = sadd.s32 %s497, %s498
        %s500 = smul.addr %s499, 8
        %s501 = scalar_lea.vmem %s4, %s500
      $region48: #{skip_align_forward.1} parent=43 // pred_fallthru
        _
    $region44: #{skip_align_forward.1} parent=5 // pred_fallthru
      _
  $region6: #{skip_align_forward.1} parent=0 // loop_footer
    %s14 = sadd.s32 1, %s10
  $region7: #{skip_align_forward.1} parent=0 // loop_footer_branch
    %9 = sbr.rel target = $region3
  $region8: #{skip_align_forward.1} parent=0 // loop_exit
    _

</llo_original>
